<compile_context>
chip_gen: v7x
topology: tpu7x:2x2x1
jax: 0.10.0
libtpu: 0.0.40
codegen_flags: <defaults>
</compile_context>

<pallas_src>
import functools

import jax
import jax.numpy as jnp
from jax import lax
from jax.experimental import pallas as pl
from jax.experimental.pallas import tpu as pltpu


def _graphconv_kernel(a_ref, x_ref, w_ref, b_ref, out_ref,
                      *, adj_sq, scale_identity, activation):
    # a_ref:   (Bt, N, N)     adjacency block
    # x_ref:   (Bt, N, Fin)   node-feature block
    # w_ref:   (Fin, Fout)    pre-transposed linear weight (resident)
    # b_ref:   (1, Fout)      linear bias (resident, zero-padded)
    # out_ref: (Bt, N, Fout)
    A = a_ref[...].astype(jnp.float32)       # (Bt, N, N)
    x = x_ref[...].astype(jnp.float32)       # (Bt, N, Fin)
    Wt = w_ref[...]                          # (Fin, Fout)
    bias = b_ref[...]                        # (1, Fout)

    Bt, N, Fin = x.shape
    Fout = Wt.shape[1]

    if adj_sq:
        A = jnp.einsum('bik,bkj->bij', A, A,
                       preferred_element_type=jnp.float32)

    c = 2.0 if scale_identity else 1.0
    # Folded normalization: colsum(A_hat) = colsum(A) + c  (== torch.sum(A_hat, 1)).
    d = lax.rsqrt(jnp.sum(A, axis=1) + (c + 1e-5))   # (Bt, N)
    d_col = d[:, :, None]                            # (Bt, N, 1)
    xs = d_col * x                                   # (Bt, N, Fin)

    if Fin <= Fout:
        # Propagate in the narrow Fin dimension, then one flattened linear matmul.
        y = d_col * (jnp.einsum('bij,bjf->bif', A, xs,
                                preferred_element_type=jnp.float32) + c * xs)
        out = jnp.dot(y.reshape(Bt * N, Fin), Wt,
                      preferred_element_type=jnp.float32)
        out = out.reshape(Bt, N, Fout) + bias
    else:
        # Padded Fout is narrower: apply the linear layer first so the N^2-sized
        # propagation matmul contracts with Fout instead of Fin.
        z = jnp.dot(xs.reshape(Bt * N, Fin), Wt,
                    preferred_element_type=jnp.float32).reshape(Bt, N, Fout)
        out = d_col * (jnp.einsum('bij,bjf->bif', A, z,
                                  preferred_element_type=jnp.float32) + c * z)
        out = out + bias

    if activation is not None:
        out = activation(out)

    out_ref[...] = out.astype(out_ref.dtype)


def _round_up(v, m):
    return (v + m - 1) // m * m


def _pick_batch_block(B, N, Fin, Fout, budget_bytes=40 << 20):
    """Largest divisor of B whose per-step VMEM footprint fits the budget."""
    # double-buffered A/x/out blocks + in-kernel f32 temporaries (rough upper bound)
    per_graph = 4 * (3 * N * N + 4 * N * Fin + 3 * N * Fout)
    bt = max(1, min(B, budget_bytes // max(per_graph, 1)))
    while B % bt != 0:
        bt -= 1
    return bt


def graph_conv(x, A, W, b, *, adj_sq=False, scale_identity=False,
               activation=None):
    """x: [B, N, Fin] f32, A: [B, N, N] f32, W: [Fout, Fin], b: [Fout]."""
    B, N, Fin = x.shape
    Fout = W.shape[0]

    # Lane-dense output: pad Fout up to a multiple of 128 with zeros, slice after.
    Fout_pad = _round_up(Fout, 128)
    Wt = jnp.transpose(W)                                    # (Fin, Fout)
    if Fout_pad != Fout:
        Wt = jnp.pad(Wt, ((0, 0), (0, Fout_pad - Fout)))
        b_pad = jnp.pad(b, (0, Fout_pad - Fout))
    else:
        b_pad = b
    b2d = b_pad.reshape(1, Fout_pad)

    Bt = _pick_batch_block(B, N, Fin, Fout_pad)
    grid = (B // Bt,)

    kernel = functools.partial(_graphconv_kernel,
                               adj_sq=adj_sq,
                               scale_identity=scale_identity,
                               activation=activation)

    flops = 2 * B * (N * N * min(Fin, Fout_pad) + N * Fin * Fout_pad)
    if adj_sq:
        flops += 2 * B * N * N * N
    bytes_accessed = 4 * (B * (N * N + N * Fin + N * Fout_pad)
                          + Fin * Fout_pad + Fout_pad)
    cost = pl.CostEstimate(flops=flops, transcendentals=B * N,
                           bytes_accessed=bytes_accessed)

    out = pl.pallas_call(
        kernel,
        out_shape=jax.ShapeDtypeStruct((B, N, Fout_pad), x.dtype),
        grid_spec=pltpu.PrefetchScalarGridSpec(
            num_scalar_prefetch=0,
            grid=grid,
            in_specs=[
                pl.BlockSpec((Bt, N, N), lambda i: (i, 0, 0)),      # A block
                pl.BlockSpec((Bt, N, Fin), lambda i: (i, 0, 0)),    # x block
                pl.BlockSpec((Fin, Fout_pad), lambda i: (0, 0)),    # W^T, resident
                pl.BlockSpec((1, Fout_pad), lambda i: (0, 0)),      # bias, resident
            ],
            out_specs=pl.BlockSpec((Bt, N, Fout_pad), lambda i: (i, 0, 0)),
        ),
        compiler_params=pltpu.CompilerParams(
            dimension_semantics=("parallel",),
            vmem_limit_bytes=56 << 20),
        cost_estimate=cost,
    )(A, x, Wt, b2d)

    if Fout_pad != Fout:
        out = out[:, :, :Fout]
    return out, A


def graph_conv_ref(x, A, W, b, *, adj_sq=False, scale_identity=False,
                   activation=None):
    """Pure-JAX reference mirroring the PyTorch module exactly."""
    N = A.shape[1]
    if adj_sq:
        A = jnp.einsum('bij,bjk->bik', A, A)
    I = jnp.eye(N, dtype=A.dtype)[None]
    if scale_identity:
        I = 2.0 * I
    A_hat = A + I
    D_hat = (jnp.sum(A_hat, axis=1) + 1e-5) ** (-0.5)
    L = D_hat[:, :, None] * A_hat * D_hat[:, None, :]
    y = jnp.einsum('bij,bjf->bif', L, x)
    out = jnp.einsum('bif,of->bio', y, W) + b
    if activation is not None:
        out = activation(out)
    return out, A


if __name__ == "__main__":
    key = jax.random.PRNGKey(0)

    def make_inputs(k, B, N, Fin, Fout):
        kx, ka, kw, kb = jax.random.split(k, 4)
        x = jax.random.normal(kx, (B, N, Fin), dtype=jnp.float32)
        # Symmetric 0/1 adjacency with no self-loops (typical GCN input).
        A_raw = (jax.random.uniform(ka, (B, N, N)) > 0.7).astype(jnp.float32)
        A = jnp.clip(A_raw + jnp.transpose(A_raw, (0, 2, 1)), 0.0, 1.0)
        A = A * (1.0 - jnp.eye(N, dtype=jnp.float32)[None])
        # Deterministic nn.Linear-style init: U(-1/sqrt(Fin), 1/sqrt(Fin)).
        bound = 1.0 / (Fin ** 0.5)
        W = jax.random.uniform(kw, (Fout, Fin), minval=-bound, maxval=bound,
                               dtype=jnp.float32)
        b = jax.random.uniform(kb, (Fout,), minval=-bound, maxval=bound,
                               dtype=jnp.float32)
        return x, A, W, b

    configs = [
        dict(B=2, N=16, Fin=8, Fout=32,
             adj_sq=False, scale_identity=False, activation=None),
        dict(B=2, N=16, Fin=8, Fout=32,
             adj_sq=True, scale_identity=True, activation=jax.nn.relu),
        # Fin > padded Fout exercises the "linear first" matmul association.
        dict(B=2, N=16, Fin=256, Fout=32,
             adj_sq=False, scale_identity=False, activation=None),
    ]

    for i, cfg in enumerate(configs):
        key, sub = jax.random.split(key)
        x, A, W, b = make_inputs(sub, cfg["B"], cfg["N"], cfg["Fin"], cfg["Fout"])
        kw_args = dict(adj_sq=cfg["adj_sq"],
                       scale_identity=cfg["scale_identity"],
                       activation=cfg["activation"])

        out, A_out = graph_conv(x, A, W, b, **kw_args)
        out = jax.block_until_ready(out)

        ref_out, _ = graph_conv_ref(x, A, W, b, **kw_args)
        assert out.shape == ref_out.shape
        assert jnp.allclose(out, ref_out, atol=1e-4, rtol=1e-4), \
            f"mismatch vs reference (config {i})"

    print("KERNEL_OK")
</pallas_src>

<mosaic_0001>
module attributes {stable_mosaic.version = 11 : i64} {
  func.func @_graphconv_kernel(%arg0: i32, %arg1: memref<2x16x16xf32, #tpu.memory_space<vmem>>, %arg2: memref<2x16x8xf32, #tpu.memory_space<vmem>>, %arg3: memref<8x128xf32, #tpu.memory_space<vmem>>, %arg4: memref<1x128xf32, #tpu.memory_space<vmem>>, %arg5: memref<2x16x128xf32, #tpu.memory_space<vmem>>) attributes {dimension_semantics = [#tpu.dimension_semantics<parallel>], iteration_bounds = array<i64: 1>, scalar_prefetch = 0 : i64, scratch_operands = 0 : i64, tpu.core_type = #tpu.core_type<tc>, window_params = [{transform_indices = @transform_0, window_bounds = array<i64: 2, 16, 16>}, {transform_indices = @transform_1, window_bounds = array<i64: 2, 16, 8>}, {pipeline_mode = #tpu.pipeline_mode<synchronous>, transform_indices = @transform_2, window_bounds = array<i64: 8, 128>}, {pipeline_mode = #tpu.pipeline_mode<synchronous>, transform_indices = @transform_3, window_bounds = array<i64: 1, 128>}, {transform_indices = @transform_4, window_bounds = array<i64: 2, 16, 128>}]} {
    %c0 = arith.constant 0 : index
    %c0_0 = arith.constant 0 : index
    %c0_1 = arith.constant 0 : index
    %0 = vector.load %arg1[%c0, %c0_0, %c0_1] : memref<2x16x16xf32, #tpu.memory_space<vmem>>, vector<2x16x16xf32>
    %c0_2 = arith.constant 0 : index
    %c0_3 = arith.constant 0 : index
    %c0_4 = arith.constant 0 : index
    %1 = vector.load %arg2[%c0_2, %c0_3, %c0_4] : memref<2x16x8xf32, #tpu.memory_space<vmem>>, vector<2x16x8xf32>
    %c0_5 = arith.constant 0 : index
    %c0_6 = arith.constant 0 : index
    %2 = vector.load %arg3[%c0_5, %c0_6] : memref<8x128xf32, #tpu.memory_space<vmem>>, vector<8x128xf32>
    %c0_7 = arith.constant 0 : index
    %c0_8 = arith.constant 0 : index
    %3 = vector.load %arg4[%c0_7, %c0_8] : memref<1x128xf32, #tpu.memory_space<vmem>>, vector<1x128xf32>
    %cst = arith.constant dense<0.000000e+00> : vector<2x16xf32>
    %4 = vector.multi_reduction <add>, %0, %cst [1] : vector<2x16x16xf32> to vector<2x16xf32>
    %cst_9 = arith.constant 1.000010e+00 : f32
    %5 = vector.broadcast %cst_9 : f32 to vector<2x16xf32>
    %6 = arith.addf %4, %5 : vector<2x16xf32>
    %7 = math.rsqrt %6 : vector<2x16xf32>
    %8 = vector.shape_cast %7 : vector<2x16xf32> to vector<2x16x1xf32>
    %9 = vector.broadcast %8 : vector<2x16x1xf32> to vector<2x16x8xf32>
    %10 = arith.mulf %9, %1 : vector<2x16x8xf32>
    "tpu.trace_start"() <{level = 10 : i32, message = "bij,bjf->bif"}> : () -> ()
    %cst_10 = arith.constant dense<0.000000e+00> : vector<2x16x8xf32>
    %11 = tpu.matmul %0, %10, %cst_10 {dimension_numbers = #tpu.dot_dimension_numbers<[2], [1], [1], [2], [0, 0, 0, 1, 1, 2], [0], [0]>} : vector<2x16x16xf32>, vector<2x16x8xf32>, vector<2x16x8xf32> -> vector<2x16x8xf32>
    "tpu.trace_stop"() : () -> ()
    %cst_11 = arith.constant 1.000000e+00 : f32
    %12 = vector.broadcast %cst_11 : f32 to vector<2x16x8xf32>
    %13 = arith.mulf %12, %10 : vector<2x16x8xf32>
    %14 = arith.addf %11, %13 : vector<2x16x8xf32>
    %15 = vector.broadcast %8 : vector<2x16x1xf32> to vector<2x16x8xf32>
    %16 = arith.mulf %15, %14 : vector<2x16x8xf32>
    %17 = vector.shape_cast %16 : vector<2x16x8xf32> to vector<32x8xf32>
    %cst_12 = arith.constant dense<0.000000e+00> : vector<32x128xf32>
    %18 = tpu.matmul %17, %2, %cst_12 {dimension_numbers = #tpu.dot_dimension_numbers<[1], [0], [0], [1], [0, 0, 1, 1], [], []>} : vector<32x8xf32>, vector<8x128xf32>, vector<32x128xf32> -> vector<32x128xf32>
    %19 = vector.shape_cast %18 : vector<32x128xf32> to vector<2x16x128xf32>
    %20 = vector.shape_cast %3 : vector<1x128xf32> to vector<1x1x128xf32>
    %21 = vector.broadcast %20 : vector<1x1x128xf32> to vector<2x16x128xf32>
    %22 = arith.addf %19, %21 : vector<2x16x128xf32>
    %c0_13 = arith.constant 0 : index
    %c0_14 = arith.constant 0 : index
    %c0_15 = arith.constant 0 : index
    %23 = vector.load %arg5[%c0_13, %c0_14, %c0_15] : memref<2x16x128xf32, #tpu.memory_space<vmem>>, vector<2x16x128xf32>
    tpu.vector_store %arg5[%c0_13, %c0_14, %c0_15], %22 {strides = array<i32>} : memref<2x16x128xf32, #tpu.memory_space<vmem>>, vector<2x16x128xf32>,
    return
  }
  func.func @transform_0(%arg0: i32) -> (i32, i32, i32) {
    %c0_i32 = arith.constant 0 : i32
    %c0_i32_0 = arith.constant 0 : i32
    %c0_i32_1 = arith.constant 0 : i32
    return %arg0, %c0_i32, %c0_i32_0 : i32, i32, i32
  }
  func.func @transform_1(%arg0: i32) -> (i32, i32, i32) {
    %c0_i32 = arith.constant 0 : i32
    %c0_i32_0 = arith.constant 0 : i32
    %c0_i32_1 = arith.constant 0 : i32
    return %arg0, %c0_i32, %c0_i32_0 : i32, i32, i32
  }
  func.func @transform_2(%arg0: i32) -> (i32, i32) {
    %c0_i32 = arith.constant 0 : i32
    %c0_i32_0 = arith.constant 0 : i32
    %c0_i32_1 = arith.constant 0 : i32
    return %c0_i32, %c0_i32_0 : i32, i32
  }
  func.func @transform_3(%arg0: i32) -> (i32, i32) {
    %c0_i32 = arith.constant 0 : i32
    %c0_i32_0 = arith.constant 0 : i32
    %c0_i32_1 = arith.constant 0 : i32
    return %c0_i32, %c0_i32_0 : i32, i32
  }
  func.func @transform_4(%arg0: i32) -> (i32, i32, i32) {
    %c0_i32 = arith.constant 0 : i32
    %c0_i32_0 = arith.constant 0 : i32
    %c0_i32_1 = arith.constant 0 : i32
    return %arg0, %c0_i32, %c0_i32_0 : i32, i32, i32
  }
}

</mosaic_0001>

<llo_original>
// kernel: tpu_custom_call.1
$region0: #{tpu_custom_call.1}
  #allocation0 [shape = 'u32[]', space=smem, size = 0x4, offset = 0x4, fixed_abs, tag = 'smem constant byte address 0x4 - core index']
  #allocation1 [shape = 'u32[144,128]{1,0:T(1,128)}', space=vmem, size = 0x12000, scoped, tag = 'internal scratch']
  %s0 = inlined_call_operand.vmem [shape: f32[2,16,16], index: 0, kind: input, shape index: {}]
  %s1 = inlined_call_operand.vmem [shape: f32[2,16,8], index: 1, kind: input, shape index: {}]
  %s2 = inlined_call_operand.vmem [shape: f32[8,128], index: 2, kind: input, shape index: {}]
  %s3 = inlined_call_operand.vmem [shape: f32[1,128], index: 3, kind: input, shape index: {}]
  %s4 = inlined_call_operand.hbm [shape: f32[2,16,128], index: 4, kind: output, shape index: {}]
  %s5 = sld [smem:[#allocation0]]
  $region26: #{tpu_custom_call.1} parent=0
    _
  %s7 = ssub.s32 1, %s5
  %s8 = scalar_select 0, %s7, %s5
  $region1: #{tpu_custom_call.1} parent=0
    #allocation2 [shape = 'u8[16384]{0}', space=vmem, size = 0x4000, scoped, tag = 'output window, operand 0, single buffered']
    #allocation3 [shape = 's32[1]{0}', space=sflag, size = 0x4, scoped, tag = 'scoped memory for tpu_custom_call.1']
    %9 = vsyncpa [#allocation3], 0
    // Predicated region
    $region2: #{tpu_custom_call.1} parent=1 // pred_check
      _
    $region3: #{tpu_custom_call.1} parent=1 // pred_check_branch
      %11 = sbr.rel (0) target = $region5
    $region4: #{tpu_custom_call.1} parent=1 // pred_region
      _
    $region5: #{tpu_custom_call.1} parent=1 // pred_fallthru
      _
    // Predicated region
    $region6: #{tpu_custom_call.1} parent=1 // pred_check
      _
    $region7: #{tpu_custom_call.1} parent=1 // pred_check_branch
      %13 = sbr.rel (0) target = $region9
    $region8: #{tpu_custom_call.1} parent=1 // pred_region
      _
    $region9: #{tpu_custom_call.1} parent=1 // pred_fallthru
      _
    // Predicated region
    $region10: #{tpu_custom_call.1} parent=1 // pred_check
      _
    $region11: #{tpu_custom_call.1} parent=1 // pred_check_branch
      %15 = sbr.rel (0) target = $region13
    $region12: #{tpu_custom_call.1} parent=1 // pred_region
      _
    $region13: #{tpu_custom_call.1} parent=1 // pred_fallthru
      _
    // Predicated region
    $region14: #{tpu_custom_call.1} parent=1 // pred_check
      _
    $region15: #{tpu_custom_call.1} parent=1 // pred_check_branch
      %17 = sbr.rel (0) target = $region17
    $region16: #{tpu_custom_call.1} parent=1 // pred_region
      _
    $region17: #{tpu_custom_call.1} parent=1 // pred_fallthru
      _
    %v18 = vld [vmem:[%s0] sm:$0xff]
    %v19 = vld [vmem:[%s0 + $0x8] sm:$0xff]
    %v20 = vld [vmem:[%s0 + $0x10] sm:$0xff]
    %v21 = vld [vmem:[%s0 + $0x18] sm:$0xff]
    %v22 = vld [vmem:[%s1] sm:$0xff]
    %v23 = vld [vmem:[%s1 + $0x8] sm:$0xff]
    %v24 = vld [vmem:[%s1 + $0x10] sm:$0xff]
    %v25 = vld [vmem:[%s1 + $0x18] sm:$0xff]
    %v26 = vld [vmem:[%s2] sm:$0xff]
    %v27 = vld [vmem:[%s3] sm:$0x1]
    %vm28 = vcmask 130048
    %v29 = vsel %vm28, %v18, 0.0
    %v30 = vsel %vm28, %v19, 0.0
    %v31 = vadd.f32 %v29, %v30
    %v32 = vrot.slane %v31, 4
    %v33 = vadd.f32 %v31, %v32
    %v34 = vrot.slane %v33, 2
    %v35 = vadd.f32 %v33, %v34
    %v36 = vrot.slane %v35, 1
    %v37 = vadd.f32 %v35, %v36
    %v38 = vsel %vm28, %v20, 0.0
    %v39 = vsel %vm28, %v21, 0.0
    %v40 = vadd.f32 %v38, %v39
    %v41 = vrot.slane %v40, 4
    %v42 = vadd.f32 %v40, %v41
    %v43 = vrot.slane %v42, 2
    %v44 = vadd.f32 %v42, %v43
    %v45 = vrot.slane %v44, 1
    %v46 = vadd.f32 %v44, %v45
    %v47 = vadd.f32 %v37, 1.00001
    %v48 = vadd.f32 %v46, 1.00001
    %v49 = vrsqrt.pop %v47
    %v50 = vrsqrt.pop %v48
    %52 = vbcast.lane.b32.xlu0 %v49, 256
    %v53 = vpop.permute.xlu0 %52
    %s55 = sor.u32 256, 8
    %56 = vbcast.lane.b32.xlu0 %v49, %s55
    %v57 = vpop.permute.xlu0 %56
    %59 = vbcast.lane.b32.xlu0 %v50, 256
    %v60 = vpop.permute.xlu0 %59
    %s62 = sor.u32 256, 8
    %63 = vbcast.lane.b32.xlu0 %v50, %s62
    %v64 = vpop.permute.xlu0 %63
    %v65 = vmul.f32 %v53, %v22
    %v66 = vmul.f32 %v57, %v23
    %v67 = vmul.f32 %v60, %v24
    %v68 = vmul.f32 %v64, %v25
    %v70 = vsel %vm28, %v18, 0
    %v73 = vsel %vm28, %v19, 0
    %75 = vmatprep.subr.mxu0 0.0
    %76 = vmatpush1.msra.mxu0 %v65
    %77 = vmatprep.subr.mxu0 0.0
    %78 = vmatpush1.msra.mxu0 %v66
    %79 = vmatprep.subr.mxu0 0.0
    %80 = vmatpush1.msra.mxu0 0.0
    %81 = vmatprep.subr.mxu0 0.0
    %82 = vmatpush1.msra.mxu0 0.0
    %83 = vmatprep.subr.mxu0 0.0
    %84 = vmatpush1.msra.mxu0 0.0
    %85 = vmatprep.subr.mxu0 0.0
    %86 = vmatpush1.msra.mxu0 0.0
    %87 = vmatprep.subr.mxu0 0.0
    %88 = vmatpush1.msra.mxu0 0.0
    %89 = vmatprep.subr.mxu0 0.0
    %90 = vmatpush1.msra.mxu0 0.0
    %91 = vmatprep.subr.mxu0 0.0
    %92 = vmatpush1.msra.mxu0 0.0
    %93 = vmatprep.subr.mxu0 0.0
    %94 = vmatpush1.msra.mxu0 0.0
    %95 = vmatprep.subr.mxu0 0.0
    %96 = vmatpush1.msra.mxu0 0.0
    %97 = vmatprep.subr.mxu0 0.0
    %98 = vmatpush1.msra.mxu0 0.0
    %99 = vmatprep.subr.mxu0 0.0
    %100 = vmatpush1.msra.mxu0 0.0
    %101 = vmatprep.subr.mxu0 0.0
    %102 = vmatpush1.msra.mxu0 0.0
    %103 = vmatprep.subr.mxu0 0.0
    %104 = vmatpush1.msra.mxu0 0.0
    %105 = vmatprep.subr.mxu0 0.0
    %106 = vmatpush1.msra.mxu0 0.0
    %107 = vmatprep.subr.mxu0 0.0
    %108 = vmatpush1.msra.mxu0 0.0
    %109 = vmatprep.subr.mxu0 0.0
    %110 = vmatpush1.msra.mxu0 0.0
    %111 = vmatprep.subr.mxu0 0.0
    %112 = vmatpush1.msra.mxu0 0.0
    %113 = vmatprep.subr.mxu0 0.0
    %114 = vmatpush1.msra.mxu0 0.0
    %115 = vmatprep.subr.mxu0 0.0
    %116 = vmatpush1.msra.mxu0 0.0
    %117 = vmatprep.subr.mxu0 0.0
    %118 = vmatpush1.msra.mxu0 0.0
    %119 = vmatprep.subr.mxu0 0.0
    %120 = vmatpush1.msra.mxu0 0.0
    %121 = vmatprep.subr.mxu0 0.0
    %122 = vmatpush1.msra.mxu0 0.0
    %123 = vmatprep.subr.mxu0 0.0
    %124 = vmatpush1.msra.mxu0 0.0
    %125 = vmatprep.subr.mxu0 0.0
    %126 = vmatpush1.msra.mxu0 0.0
    %127 = vmatprep.subr.mxu0 0.0
    %128 = vmatpush1.msra.mxu0 0.0
    %129 = vmatprep.subr.mxu0 0.0
    %130 = vmatpush1.msra.mxu0 0.0
    %131 = vmatprep.subr.mxu0 0.0
    %132 = vmatpush1.msra.mxu0 0.0
    %133 = vmatprep.subr.mxu0 0.0
    %134 = vmatpush1.msra.mxu0 0.0
    %135 = vmatprep.subr.mxu0 0.0
    %136 = vmatpush1.msra.mxu0 0.0
    %137 = vmatprep.subr.mxu0 0.0
    %138 = vmatpush1.msra.mxu0 0.0
    %139 = vmatprep.mubr.f32.mxu0 0.0
    %140 = vmatmul.mubr.f32.gmra.mrb[0].mxu0 %v70
    %v141 = vpop.f32.mrb[0].mxu0
    %v142 = vadd.f32 %v65, %v141
    %v143 = vpop.f32.mrb[0].mxu0
    %144 = vmatprep.mubr.f32.mxu0 0.0
    %145 = vmatmul.mubr.f32.gmra.mrb[0].mxu0 %v73
    %v146 = vpop.f32.mrb[0].mxu0
    %v147 = vadd.f32 %v66, %v146
    %v148 = vpop.f32.mrb[0].mxu0
    %149 = vdwg.mxu0
    %v151 = vsel %vm28, %v20, 0
    %v154 = vsel %vm28, %v21, 0
    %156 = vmatprep.subr.mxu0 0.0
    %157 = vmatpush1.msra.mxu0 %v67
    %158 = vmatprep.subr.mxu0 0.0
    %159 = vmatpush1.msra.mxu0 %v68
    %160 = vmatprep.subr.mxu0 0.0
    %161 = vmatpush1.msra.mxu0 0.0
    %162 = vmatprep.subr.mxu0 0.0
    %163 = vmatpush1.msra.mxu0 0.0
    %164 = vmatprep.subr.mxu0 0.0
    %165 = vmatpush1.msra.mxu0 0.0
    %166 = vmatprep.subr.mxu0 0.0
    %167 = vmatpush1.msra.mxu0 0.0
    %168 = vmatprep.subr.mxu0 0.0
    %169 = vmatpush1.msra.mxu0 0.0
    %170 = vmatprep.subr.mxu0 0.0
    %171 = vmatpush1.msra.mxu0 0.0
    %172 = vmatprep.subr.mxu0 0.0
    %173 = vmatpush1.msra.mxu0 0.0
    %174 = vmatprep.subr.mxu0 0.0
    %175 = vmatpush1.msra.mxu0 0.0
    %176 = vmatprep.subr.mxu0 0.0
    %177 = vmatpush1.msra.mxu0 0.0
    %178 = vmatprep.subr.mxu0 0.0
    %179 = vmatpush1.msra.mxu0 0.0
    %180 = vmatprep.subr.mxu0 0.0
    %181 = vmatpush1.msra.mxu0 0.0
    %182 = vmatprep.subr.mxu0 0.0
    %183 = vmatpush1.msra.mxu0 0.0
    %184 = vmatprep.subr.mxu0 0.0
    %185 = vmatpush1.msra.mxu0 0.0
    %186 = vmatprep.subr.mxu0 0.0
    %187 = vmatpush1.msra.mxu0 0.0
    %188 = vmatprep.subr.mxu0 0.0
    %189 = vmatpush1.msra.mxu0 0.0
    %190 = vmatprep.subr.mxu0 0.0
    %191 = vmatpush1.msra.mxu0 0.0
    %192 = vmatprep.subr.mxu0 0.0
    %193 = vmatpush1.msra.mxu0 0.0
    %194 = vmatprep.subr.mxu0 0.0
    %195 = vmatpush1.msra.mxu0 0.0
    %196 = vmatprep.subr.mxu0 0.0
    %197 = vmatpush1.msra.mxu0 0.0
    %198 = vmatprep.subr.mxu0 0.0
    %199 = vmatpush1.msra.mxu0 0.0
    %200 = vmatprep.subr.mxu0 0.0
    %201 = vmatpush1.msra.mxu0 0.0
    %202 = vmatprep.subr.mxu0 0.0
    %203 = vmatpush1.msra.mxu0 0.0
    %204 = vmatprep.subr.mxu0 0.0
    %205 = vmatpush1.msra.mxu0 0.0
    %206 = vmatprep.subr.mxu0 0.0
    %207 = vmatpush1.msra.mxu0 0.0
    %208 = vmatprep.subr.mxu0 0.0
    %209 = vmatpush1.msra.mxu0 0.0
    %210 = vmatprep.subr.mxu0 0.0
    %211 = vmatpush1.msra.mxu0 0.0
    %212 = vmatprep.subr.mxu0 0.0
    %213 = vmatpush1.msra.mxu0 0.0
    %214 = vmatprep.subr.mxu0 0.0
    %215 = vmatpush1.msra.mxu0 0.0
    %216 = vmatprep.subr.mxu0 0.0
    %217 = vmatpush1.msra.mxu0 0.0
    %218 = vmatprep.subr.mxu0 0.0
    %219 = vmatpush1.msra.mxu0 0.0
    %220 = vmatprep.mubr.f32.mxu0 0.0
    %221 = vmatmul.mubr.f32.gmra.mrb[0].mxu0 %v151
    %v222 = vpop.f32.mrb[0].mxu0
    %v223 = vadd.f32 %v67, %v222
    %v224 = vpop.f32.mrb[0].mxu0
    %225 = vmatprep.mubr.f32.mxu0 0.0
    %226 = vmatmul.mubr.f32.gmra.mrb[0].mxu0 %v154
    %v227 = vpop.f32.mrb[0].mxu0
    %v228 = vadd.f32 %v68, %v227
    %v229 = vpop.f32.mrb[0].mxu0
    %230 = vdwg.mxu0
    %v231 = vmul.f32 %v53, %v142
    %v232 = vmul.f32 %v57, %v147
    %v233 = vmul.f32 %v60, %v223
    %v234 = vmul.f32 %v64, %v228
    %vm235 = vcmask 64512
    %v237 = vsel %vm235, %v231, 0
    %v240 = vsel %vm235, %v232, 0
    %v243 = vsel %vm235, %v233, 0
    %v246 = vsel %vm235, %v234, 0
    %248 = vmatprep.subr.mxu0 0.0
    %249 = vmatpush1.msra.mxu0 %v26
    %250 = vmatprep.subr.mxu0 0.0
    %251 = vmatpush1.msra.mxu0 0.0
    %252 = vmatprep.subr.mxu0 0.0
    %253 = vmatpush1.msra.mxu0 0.0
    %254 = vmatprep.subr.mxu0 0.0
    %255 = vmatpush1.msra.mxu0 0.0
    %256 = vmatprep.subr.mxu0 0.0
    %257 = vmatpush1.msra.mxu0 0.0
    %258 = vmatprep.subr.mxu0 0.0
    %259 = vmatpush1.msra.mxu0 0.0
    %260 = vmatprep.subr.mxu0 0.0
    %261 = vmatpush1.msra.mxu0 0.0
    %262 = vmatprep.subr.mxu0 0.0
    %263 = vmatpush1.msra.mxu0 0.0
    %264 = vmatprep.subr.mxu0 0.0
    %265 = vmatpush1.msra.mxu0 0.0
    %266 = vmatprep.subr.mxu0 0.0
    %267 = vmatpush1.msra.mxu0 0.0
    %268 = vmatprep.subr.mxu0 0.0
    %269 = vmatpush1.msra.mxu0 0.0
    %270 = vmatprep.subr.mxu0 0.0
    %271 = vmatpush1.msra.mxu0 0.0
    %272 = vmatprep.subr.mxu0 0.0
    %273 = vmatpush1.msra.mxu0 0.0
    %274 = vmatprep.subr.mxu0 0.0
    %275 = vmatpush1.msra.mxu0 0.0
    %276 = vmatprep.subr.mxu0 0.0
    %277 = vmatpush1.msra.mxu0 0.0
    %278 = vmatprep.subr.mxu0 0.0
    %279 = vmatpush1.msra.mxu0 0.0
    %280 = vmatprep.subr.mxu0 0.0
    %281 = vmatpush1.msra.mxu0 0.0
    %282 = vmatprep.subr.mxu0 0.0
    %283 = vmatpush1.msra.mxu0 0.0
    %284 = vmatprep.subr.mxu0 0.0
    %285 = vmatpush1.msra.mxu0 0.0
    %286 = vmatprep.subr.mxu0 0.0
    %287 = vmatpush1.msra.mxu0 0.0
    %288 = vmatprep.subr.mxu0 0.0
    %289 = vmatpush1.msra.mxu0 0.0
    %290 = vmatprep.subr.mxu0 0.0
    %291 = vmatpush1.msra.mxu0 0.0
    %292 = vmatprep.subr.mxu0 0.0
    %293 = vmatpush1.msra.mxu0 0.0
    %294 = vmatprep.subr.mxu0 0.0
    %295 = vmatpush1.msra.mxu0 0.0
    %296 = vmatprep.subr.mxu0 0.0
    %297 = vmatpush1.msra.mxu0 0.0
    %298 = vmatprep.subr.mxu0 0.0
    %299 = vmatpush1.msra.mxu0 0.0
    %300 = vmatprep.subr.mxu0 0.0
    %301 = vmatpush1.msra.mxu0 0.0
    %302 = vmatprep.subr.mxu0 0.0
    %303 = vmatpush1.msra.mxu0 0.0
    %304 = vmatprep.subr.mxu0 0.0
    %305 = vmatpush1.msra.mxu0 0.0
    %306 = vmatprep.subr.mxu0 0.0
    %307 = vmatpush1.msra.mxu0 0.0
    %308 = vmatprep.subr.mxu0 0.0
    %309 = vmatpush1.msra.mxu0 0.0
    %310 = vmatprep.subr.mxu0 0.0
    %311 = vmatpush1.msra.mxu0 0.0
    %312 = vmatprep.mubr.f32.mxu0 0.0
    %313 = vmatmul.mubr.f32.gmra.mrb[0].mxu0 %v237
    %v314 = vpop.f32.mrb[0].mxu0
    %v315 = vadd.f32 0.0, %v314
    %v316 = vpop.f32.mrb[0].mxu0
    %317 = vmatprep.mubr.f32.mxu0 0.0
    %318 = vmatmul.mubr.f32.gmra.mrb[0].mxu0 %v240
    %v319 = vpop.f32.mrb[0].mxu0
    %v320 = vadd.f32 0.0, %v319
    %v321 = vpop.f32.mrb[0].mxu0
    %322 = vmatprep.mubr.f32.mxu0 0.0
    %323 = vmatmul.mubr.f32.gmra.mrb[0].mxu0 %v243
    %v324 = vpop.f32.mrb[0].mxu0
    %v325 = vadd.f32 0.0, %v324
    %v326 = vpop.f32.mrb[0].mxu0
    %327 = vmatprep.mubr.f32.mxu0 0.0
    %328 = vmatmul.mubr.f32.gmra.mrb[0].mxu0 %v246
    %v329 = vpop.f32.mrb[0].mxu0
    %v330 = vadd.f32 0.0, %v329
    %v331 = vpop.f32.mrb[0].mxu0
    %332 = vdwg.mxu0
    %v334 = vlaneseq
    %v335 = vshrl.u32 %v334, 7
    %v336 = vsub.s32 0, %v335
    %v337 = vrot.slane %v27, %v336
    %v339 = vadd.f32 %v315, %v337
    %v340 = vadd.f32 %v320, %v337
    %v341 = vadd.f32 %v325, %v337
    %v342 = vadd.f32 %v330, %v337
    %343 = vst [vmem:[#allocation2] sm:$0xff] %v339
    %344 = vst [vmem:[#allocation2 + $0x8] sm:$0xff] %v340
    %345 = vst [vmem:[#allocation2 + $0x10] sm:$0xff] %v341
    %346 = vst [vmem:[#allocation2 + $0x18] sm:$0xff] %v342
    // Predicated region
    $region18: #{tpu_custom_call.1} parent=1 // pred_check
      _
    $region19: #{tpu_custom_call.1} parent=1 // pred_check_branch
      %348 = sbr.rel (0) target = $region21
    $region20: #{tpu_custom_call.1} parent=1 // pred_region
      %s350 = ssub.s32 512, 512
      %351 = vsyncadd [#allocation3], %s350
      %s352 = sshll.u32 [#allocation2], 4
      %s353 = int_to_ptr.vmem [resolvable:$true] %s352
      %358 = dma.vmem_to_hbm [thread:$0]  %s353, 512, %s4, [#allocation3], 128, 128, 8
    $region21: #{tpu_custom_call.1} parent=1 // pred_fallthru
      _
    // Predicated region
    $region22: #{tpu_custom_call.1} parent=1 // pred_check
      _
    $region23: #{tpu_custom_call.1} parent=1 // pred_check_branch
      %360 = sbr.rel (0) target = $region25
    $region24: #{tpu_custom_call.1} parent=1 // pred_region
      %361 = dma.done [#allocation3], 512
    $region25: #{tpu_custom_call.1} parent=1 // pred_fallthru
      _
    %362 = vsyncpa [#allocation3], 1

</llo_original>
